<compile_context>
chip_gen: v7x
topology: tpu7x:2x2x1
jax: 0.10.0
libtpu: 0.0.40
codegen_flags: <defaults>
</compile_context>

<pallas_src>
import functools

import numpy as np

import jax
import jax.numpy as jnp
from jax import lax
from jax.experimental import pallas as pl
from jax.experimental.pallas import tpu as pltpu


# -----------------------------------------------------------------------------
# Pallas kernel: one image per grid step, channel-major (C, H*W) layout.
# -----------------------------------------------------------------------------
def bottleneck_kernel(H, W, P, Cout,
                      x_ref,       # (1, Cin, HW)     f32
                      w1_ref,      # (P, Cin)         bf16  scale-folded conv1^T
                      w2_ref,      # (P, 9*P)         bf16  scale-folded fused 3x3
                      w3_ref,      # (Cout, P)        bf16  scale-folded conv3^T
                      bias_ref,    # (2*P + Cout, 1)  f32   [b1; b2; b3]
                      mask_ref,    # (9, 1, HW)       f32   constant border masks
                      out_ref):    # (1, Cout, HW)
    HW = H * W

    # Lane-dense image slab: last dim H*W = 256 -> full 128-lane vregs.
    x = x_ref[0]                                            # (Cin, HW) f32

    b_all = bias_ref[...]                                   # (2P+Cout, 1) f32
    b1 = b_all[0:P]                                         # (P, 1)
    b2 = b_all[P:2 * P]                                     # (P, 1)
    b3 = b_all[2 * P:2 * P + Cout]                          # (Cout, 1)

    # ---- conv1 (1x1, BN1 scale pre-folded) + bias + ReLU --------------------
    h1 = jnp.dot(w1_ref[...], x.astype(jnp.bfloat16),
                 preferred_element_type=jnp.float32)        # (P, HW) f32
    h1 = jnp.maximum(h1 + b1, 0.0)

    # ---- conv2 (3x3, stride=1, pad=1, BN2 scale pre-folded) + bias + ReLU ---
    # The 9 taps are static lane rotations of h1 (on the XLU) multiplied by
    # precomputed border masks; stacked so conv2 is ONE MXU matmul with K=9*P.
    taps = []
    k = 0
    for kh in range(3):
        dh = kh - 1
        for kw in range(3):
            dw = kw - 1
            s = dh * W + dw
            t = h1 if s == 0 else pltpu.roll(h1, shift=(-s) % HW, axis=1)
            taps.append(t * mask_ref[k])                    # (P, HW) * (1, HW)
            k += 1
    taps = jnp.concatenate(taps, axis=0).astype(jnp.bfloat16)   # (9*P, HW)
    h2 = jnp.dot(w2_ref[...], taps, preferred_element_type=jnp.float32)
    h2 = jnp.maximum(h2 + b2, 0.0)                          # (P, HW)

    # ---- conv3 (1x1, BN3 scale pre-folded) + bias ---------------------------
    h3 = jnp.dot(w3_ref[...], h2.astype(jnp.bfloat16),
                 preferred_element_type=jnp.float32)        # (Cout, HW)
    h3 = h3 + b3

    # ---- identity residual + ReLU; lane-dense (Cout, HW) store --------------
    out_ref[0] = jnp.maximum(h3 + x, 0.0).astype(out_ref.dtype)


# -----------------------------------------------------------------------------
# Wrapper: NCHW in / NCHW out (NCHW is already channel-major per image; the
# reshape to (N, C, H*W) is free — no layout transposes).
# -----------------------------------------------------------------------------
def bottleneck_pallas(x_nchw, w1, s1, b1, w2, s2, b2, w3, s3, b3):
    N, Cin, H, W = x_nchw.shape
    P = w1.shape[1]
    Cout = w3.shape[1]
    assert Cin == Cout, "identity residual requires inplanes == planes*expansion"
    HW = H * W

    # ---- one-time weight prep (in a real model: do once, outside hot path) --
    # BN scales are folded into the weights in f32, then cast to bf16.
    # NOTE: w2 is HWIO (kh, kw, cin, cout). PyTorch Conv2d weights are OIHW
    #       (cout, cin, kh, kw) — transpose to HWIO before calling this.
    w1t = (jnp.transpose(w1) * s1[:, None]).astype(jnp.bfloat16)          # (P, Cin)
    w2f = (jnp.transpose(w2, (3, 0, 1, 2)).reshape(P, 9 * P)
           * s2[:, None]).astype(jnp.bfloat16)                            # (P, 9P)
    w3t = (jnp.transpose(w3) * s3[:, None]).astype(jnp.bfloat16)          # (Cout, P)
    bias = jnp.concatenate([b1, b2, b3]).astype(jnp.float32)
    bias = bias.reshape(2 * P + Cout, 1)                                  # packed

    # Constant 3x3 border masks (one per tap), precomputed on the host.
    lane = np.arange(HW)
    row, col = lane // W, lane % W
    masks = []
    for kh in range(3):
        for kw in range(3):
            dh, dw = kh - 1, kw - 1
            valid = ((row + dh >= 0) & (row + dh < H) &
                     (col + dw >= 0) & (col + dw < W))
            masks.append(valid.astype(np.float32))
    mask = jnp.asarray(np.stack(masks).reshape(9, 1, HW))

    x_flat = x_nchw.reshape(N, Cin, HW)

    flops = 2 * N * HW * (Cin * P + 9 * P * P + P * Cout)
    bytes_accessed = (4 * x_flat.size + 4 * N * Cout * HW +
                      2 * (w1t.size + w2f.size + w3t.size) +
                      4 * (bias.size + mask.size))

    grid_spec = pltpu.PrefetchScalarGridSpec(
        num_scalar_prefetch=0,
        grid=(N,),
        in_specs=[
            pl.BlockSpec((1, Cin, HW), lambda n: (n, 0, 0)),
            pl.BlockSpec((P, Cin), lambda n: (0, 0)),
            pl.BlockSpec((P, 9 * P), lambda n: (0, 0)),
            pl.BlockSpec((Cout, P), lambda n: (0, 0)),
            pl.BlockSpec((2 * P + Cout, 1), lambda n: (0, 0)),
            pl.BlockSpec((9, 1, HW), lambda n: (0, 0, 0)),
        ],
        out_specs=pl.BlockSpec((1, Cout, HW), lambda n: (n, 0, 0)),
    )

    out_flat = pl.pallas_call(
        functools.partial(bottleneck_kernel, H, W, P, Cout),
        out_shape=jax.ShapeDtypeStruct((N, Cout, HW), x_nchw.dtype),
        grid_spec=grid_spec,
        compiler_params=pltpu.CompilerParams(
            dimension_semantics=("parallel",),        # N=2 steps -> both v7x TCs
            vmem_limit_bytes=32 * 1024 * 1024),
        cost_estimate=pl.CostEstimate(
            flops=flops, transcendentals=0, bytes_accessed=bytes_accessed),
    )(x_flat, w1t, w2f, w3t, bias, mask)

    return out_flat.reshape(N, Cout, H, W)


# -----------------------------------------------------------------------------
# Pure-JAX reference (NCHW, folded BN).
#   fold_scales=True + matmul_dtype=bfloat16 reproduces the kernel's numerics
#   (scale folded into weights before the bf16 cast, f32 accumulation).
#   fold_scales=False + float32 is the exact PyTorch-style math.
# -----------------------------------------------------------------------------
def bottleneck_reference(x, w1, s1, b1, w2, s2, b2, w3, s3, b3,
                         matmul_dtype=jnp.float32, fold_scales=False):
    dn = ("NCHW", "HWIO", "NCHW")
    Cin, P = w1.shape
    Cout = w3.shape[1]

    def conv_bn(inp, wt, scale, bias, pad):
        if fold_scales:
            wt = wt * scale.reshape((1,) * (wt.ndim - 1) + (-1,))
        h = lax.conv_general_dilated(
            inp.astype(matmul_dtype), wt.astype(matmul_dtype), (1, 1), pad,
            dimension_numbers=dn, preferred_element_type=jnp.float32)
        if not fold_scales:
            h = h * scale.reshape(1, -1, 1, 1)
        return h + bias.reshape(1, -1, 1, 1)

    h = jnp.maximum(conv_bn(x, w1.reshape(1, 1, Cin, P), s1, b1, "VALID"), 0.0)
    h = jnp.maximum(conv_bn(h, w2, s2, b2, ((1, 1), (1, 1))), 0.0)
    h = conv_bn(h, w3.reshape(1, 1, P, Cout), s3, b3, "VALID")
    return jnp.maximum(h + x, 0.0)


def fold_bn(gamma, beta, mean, var, eps=1e-5):
    scale = gamma / jnp.sqrt(var + eps)
    bias = beta - mean * scale
    return scale, bias


if __name__ == "__main__":
    # Small config consistent with the module: Bottleneck(inplanes=16, planes=8)
    # (expansion=2 -> output channels = 16 = inplanes, stride=1, downsample=None)
    N, H, W = 2, 16, 16
    planes = 8
    inplanes = planes * 2          # Bottleneck.expansion
    Cout = planes * 2

    key = jax.random.PRNGKey(0)
    keys = jax.random.split(key, 16)

    # Input in PyTorch NCHW convention.
    x_nchw = jax.random.normal(keys[0], (N, inplanes, H, W), jnp.float32)

    # Conv weights: w1 (Cin, P), w2 HWIO (3, 3, P, P), w3 (P, Cout).
    w1 = 0.2 * jax.random.normal(keys[1], (inplanes, planes), jnp.float32)
    w2 = 0.2 * jax.random.normal(keys[2], (3, 3, planes, planes), jnp.float32)
    w3 = 0.2 * jax.random.normal(keys[3], (planes, Cout), jnp.float32)

    # BatchNorm parameters (inference-mode running statistics), deterministic.
    def bn_params(kg, kb, km, kv, c):
        gamma = 1.0 + 0.1 * jax.random.normal(kg, (c,), jnp.float32)
        beta = 0.1 * jax.random.normal(kb, (c,), jnp.float32)
        mean = 0.1 * jax.random.normal(km, (c,), jnp.float32)
        var = 1.0 + 0.1 * jax.random.uniform(kv, (c,), jnp.float32)
        return gamma, beta, mean, var

    s1, b1 = fold_bn(*bn_params(keys[4], keys[5], keys[6], keys[7], planes))
    s2, b2 = fold_bn(*bn_params(keys[8], keys[9], keys[10], keys[11], planes))
    s3, b3 = fold_bn(*bn_params(keys[12], keys[13], keys[14], keys[15], Cout))

    out = bottleneck_pallas(x_nchw, w1, s1, b1, w2, s2, b2, w3, s3, b3)
    out = jax.block_until_ready(out)

    # Numerics-matched reference: scales folded into bf16 weights, f32 accum.
    ref_fused = bottleneck_reference(x_nchw, w1, s1, b1, w2, s2, b2, w3, s3, b3,
                                     matmul_dtype=jnp.bfloat16, fold_scales=True)
    # Exact f32 PyTorch-style math.
    ref_f32 = bottleneck_reference(x_nchw, w1, s1, b1, w2, s2, b2, w3, s3, b3,
                                   matmul_dtype=jnp.float32, fold_scales=False)

    assert out.shape == (N, Cout, H, W)
    err_fused = float(jnp.max(jnp.abs(out - ref_fused)))
    assert jnp.allclose(out, ref_fused, atol=2e-2, rtol=2e-2), err_fused
    err_f32 = float(jnp.max(jnp.abs(out - ref_f32)))
    assert jnp.allclose(out, ref_f32, atol=5e-2, rtol=2e-2), err_f32

    print("KERNEL_OK")
</pallas_src>

<mosaic_0001>
module attributes {stable_mosaic.version = 11 : i64} {
  func.func @bottleneck_kernel(%arg0: i32, %arg1: memref<1x16x256xf32, #tpu.memory_space<vmem>>, %arg2: memref<8x16xbf16, #tpu.memory_space<vmem>>, %arg3: memref<8x72xbf16, #tpu.memory_space<vmem>>, %arg4: memref<16x8xbf16, #tpu.memory_space<vmem>>, %arg5: memref<32x1xf32, #tpu.memory_space<vmem>>, %arg6: memref<9x1x256xf32, #tpu.memory_space<vmem>>, %arg7: memref<1x16x256xf32, #tpu.memory_space<vmem>>) attributes {dimension_semantics = [#tpu.dimension_semantics<parallel>], iteration_bounds = array<i64: 2>, scalar_prefetch = 0 : i64, scratch_operands = 0 : i64, tpu.core_type = #tpu.core_type<tc>, window_params = [{transform_indices = @transform_0, window_bounds = array<i64: 1, 16, 256>}, {pipeline_mode = #tpu.pipeline_mode<synchronous>, transform_indices = @transform_1, window_bounds = array<i64: 8, 16>}, {pipeline_mode = #tpu.pipeline_mode<synchronous>, transform_indices = @transform_2, window_bounds = array<i64: 8, 72>}, {pipeline_mode = #tpu.pipeline_mode<synchronous>, transform_indices = @transform_3, window_bounds = array<i64: 16, 8>}, {pipeline_mode = #tpu.pipeline_mode<synchronous>, transform_indices = @transform_4, window_bounds = array<i64: 32, 1>}, {pipeline_mode = #tpu.pipeline_mode<synchronous>, transform_indices = @transform_5, window_bounds = array<i64: 9, 1, 256>}, {transform_indices = @transform_6, window_bounds = array<i64: 1, 16, 256>}]} {
    %c0 = arith.constant 0 : index
    %c0_0 = arith.constant 0 : index
    %c0_1 = arith.constant 0 : index
    %0 = vector.load %arg1[%c0, %c0_0, %c0_1] : memref<1x16x256xf32, #tpu.memory_space<vmem>>, vector<1x16x256xf32>
    %1 = vector.shape_cast %0 : vector<1x16x256xf32> to vector<16x256xf32>
    %c0_2 = arith.constant 0 : index
    %c0_3 = arith.constant 0 : index
    %2 = vector.load %arg5[%c0_2, %c0_3] : memref<32x1xf32, #tpu.memory_space<vmem>>, vector<32x1xf32>
    %3 = vector.extract_strided_slice %2 {offsets = [0, 0], sizes = [8, 1], strides = [1, 1]} : vector<32x1xf32> to vector<8x1xf32>
    %4 = vector.extract_strided_slice %2 {offsets = [8, 0], sizes = [8, 1], strides = [1, 1]} : vector<32x1xf32> to vector<8x1xf32>
    %5 = vector.extract_strided_slice %2 {offsets = [16, 0], sizes = [16, 1], strides = [1, 1]} : vector<32x1xf32> to vector<16x1xf32>
    %c0_4 = arith.constant 0 : index
    %c0_5 = arith.constant 0 : index
    %6 = vector.load %arg2[%c0_4, %c0_5] : memref<8x16xbf16, #tpu.memory_space<vmem>>, vector<8x16xbf16>
    %7 = arith.truncf %1 : vector<16x256xf32> to vector<16x256xbf16>
    %cst = arith.constant dense<0.000000e+00> : vector<8x256xf32>
    %8 = tpu.matmul %6, %7, %cst {dimension_numbers = #tpu.dot_dimension_numbers<[1], [0], [0], [1], [0, 0, 1, 1], [], []>} : vector<8x16xbf16>, vector<16x256xbf16>, vector<8x256xf32> -> vector<8x256xf32>
    %9 = vector.broadcast %3 : vector<8x1xf32> to vector<8x256xf32>
    %10 = arith.addf %8, %9 : vector<8x256xf32>
    %cst_6 = arith.constant 0.000000e+00 : f32
    %11 = vector.broadcast %cst_6 : f32 to vector<8x256xf32>
    %12 = arith.maximumf %10, %11 : vector<8x256xf32>
    %c17_i32 = arith.constant 17 : i32
    %13 = tpu.dynamic_rotate %12 by %c17_i32 dim 1 : vector<8x256xf32>, i32 -> vector<8x256xf32>
    %c0_7 = arith.constant 0 : index
    %c0_8 = arith.constant 0 : index
    %c0_9 = arith.constant 0 : index
    %14 = vector.load %arg6[%c0_7, %c0_8, %c0_9] : memref<9x1x256xf32, #tpu.memory_space<vmem>>, vector<1x1x256xf32>
    %15 = vector.shape_cast %14 : vector<1x1x256xf32> to vector<1x256xf32>
    %16 = vector.broadcast %15 : vector<1x256xf32> to vector<8x256xf32>
    %17 = arith.mulf %13, %16 : vector<8x256xf32>
    %c16_i32 = arith.constant 16 : i32
    %18 = tpu.dynamic_rotate %12 by %c16_i32 dim 1 : vector<8x256xf32>, i32 -> vector<8x256xf32>
    %c1 = arith.constant 1 : index
    %c0_10 = arith.constant 0 : index
    %c0_11 = arith.constant 0 : index
    %19 = vector.load %arg6[%c1, %c0_10, %c0_11] : memref<9x1x256xf32, #tpu.memory_space<vmem>>, vector<1x1x256xf32>
    %20 = vector.shape_cast %19 : vector<1x1x256xf32> to vector<1x256xf32>
    %21 = vector.broadcast %20 : vector<1x256xf32> to vector<8x256xf32>
    %22 = arith.mulf %18, %21 : vector<8x256xf32>
    %c15_i32 = arith.constant 15 : i32
    %23 = tpu.dynamic_rotate %12 by %c15_i32 dim 1 : vector<8x256xf32>, i32 -> vector<8x256xf32>
    %c2 = arith.constant 2 : index
    %c0_12 = arith.constant 0 : index
    %c0_13 = arith.constant 0 : index
    %24 = vector.load %arg6[%c2, %c0_12, %c0_13] : memref<9x1x256xf32, #tpu.memory_space<vmem>>, vector<1x1x256xf32>
    %25 = vector.shape_cast %24 : vector<1x1x256xf32> to vector<1x256xf32>
    %26 = vector.broadcast %25 : vector<1x256xf32> to vector<8x256xf32>
    %27 = arith.mulf %23, %26 : vector<8x256xf32>
    %c1_i32 = arith.constant 1 : i32
    %28 = tpu.dynamic_rotate %12 by %c1_i32 dim 1 : vector<8x256xf32>, i32 -> vector<8x256xf32>
    %c3 = arith.constant 3 : index
    %c0_14 = arith.constant 0 : index
    %c0_15 = arith.constant 0 : index
    %29 = vector.load %arg6[%c3, %c0_14, %c0_15] : memref<9x1x256xf32, #tpu.memory_space<vmem>>, vector<1x1x256xf32>
    %30 = vector.shape_cast %29 : vector<1x1x256xf32> to vector<1x256xf32>
    %31 = vector.broadcast %30 : vector<1x256xf32> to vector<8x256xf32>
    %32 = arith.mulf %28, %31 : vector<8x256xf32>
    %c4 = arith.constant 4 : index
    %c0_16 = arith.constant 0 : index
    %c0_17 = arith.constant 0 : index
    %33 = vector.load %arg6[%c4, %c0_16, %c0_17] : memref<9x1x256xf32, #tpu.memory_space<vmem>>, vector<1x1x256xf32>
    %34 = vector.shape_cast %33 : vector<1x1x256xf32> to vector<1x256xf32>
    %35 = vector.broadcast %34 : vector<1x256xf32> to vector<8x256xf32>
    %36 = arith.mulf %12, %35 : vector<8x256xf32>
    %c255_i32 = arith.constant 255 : i32
    %37 = tpu.dynamic_rotate %12 by %c255_i32 dim 1 : vector<8x256xf32>, i32 -> vector<8x256xf32>
    %c5 = arith.constant 5 : index
    %c0_18 = arith.constant 0 : index
    %c0_19 = arith.constant 0 : index
    %38 = vector.load %arg6[%c5, %c0_18, %c0_19] : memref<9x1x256xf32, #tpu.memory_space<vmem>>, vector<1x1x256xf32>
    %39 = vector.shape_cast %38 : vector<1x1x256xf32> to vector<1x256xf32>
    %40 = vector.broadcast %39 : vector<1x256xf32> to vector<8x256xf32>
    %41 = arith.mulf %37, %40 : vector<8x256xf32>
    %c241_i32 = arith.constant 241 : i32
    %42 = tpu.dynamic_rotate %12 by %c241_i32 dim 1 : vector<8x256xf32>, i32 -> vector<8x256xf32>
    %c6 = arith.constant 6 : index
    %c0_20 = arith.constant 0 : index
    %c0_21 = arith.constant 0 : index
    %43 = vector.load %arg6[%c6, %c0_20, %c0_21] : memref<9x1x256xf32, #tpu.memory_space<vmem>>, vector<1x1x256xf32>
    %44 = vector.shape_cast %43 : vector<1x1x256xf32> to vector<1x256xf32>
    %45 = vector.broadcast %44 : vector<1x256xf32> to vector<8x256xf32>
    %46 = arith.mulf %42, %45 : vector<8x256xf32>
    %c240_i32 = arith.constant 240 : i32
    %47 = tpu.dynamic_rotate %12 by %c240_i32 dim 1 : vector<8x256xf32>, i32 -> vector<8x256xf32>
    %c7 = arith.constant 7 : index
    %c0_22 = arith.constant 0 : index
    %c0_23 = arith.constant 0 : index
    %48 = vector.load %arg6[%c7, %c0_22, %c0_23] : memref<9x1x256xf32, #tpu.memory_space<vmem>>, vector<1x1x256xf32>
    %49 = vector.shape_cast %48 : vector<1x1x256xf32> to vector<1x256xf32>
    %50 = vector.broadcast %49 : vector<1x256xf32> to vector<8x256xf32>
    %51 = arith.mulf %47, %50 : vector<8x256xf32>
    %c239_i32 = arith.constant 239 : i32
    %52 = tpu.dynamic_rotate %12 by %c239_i32 dim 1 : vector<8x256xf32>, i32 -> vector<8x256xf32>
    %c8 = arith.constant 8 : index
    %c0_24 = arith.constant 0 : index
    %c0_25 = arith.constant 0 : index
    %53 = vector.load %arg6[%c8, %c0_24, %c0_25] : memref<9x1x256xf32, #tpu.memory_space<vmem>>, vector<1x1x256xf32>
    %54 = vector.shape_cast %53 : vector<1x1x256xf32> to vector<1x256xf32>
    %55 = vector.broadcast %54 : vector<1x256xf32> to vector<8x256xf32>
    %56 = arith.mulf %52, %55 : vector<8x256xf32>
    %57 = tpu.concatenate %17, %22, %27, %32, %36, %41, %46, %51, %56 in 0 : vector<8x256xf32>, vector<8x256xf32>, vector<8x256xf32>, vector<8x256xf32>, vector<8x256xf32>, vector<8x256xf32>, vector<8x256xf32>, vector<8x256xf32>, vector<8x256xf32> -> vector<72x256xf32>
    %58 = arith.truncf %57 : vector<72x256xf32> to vector<72x256xbf16>
    %c0_26 = arith.constant 0 : index
    %c0_27 = arith.constant 0 : index
    %59 = vector.load %arg3[%c0_26, %c0_27] : memref<8x72xbf16, #tpu.memory_space<vmem>>, vector<8x72xbf16>
    %cst_28 = arith.constant dense<0.000000e+00> : vector<8x256xf32>
    %60 = tpu.matmul %59, %58, %cst_28 {dimension_numbers = #tpu.dot_dimension_numbers<[1], [0], [0], [1], [0, 0, 1, 1], [], []>} : vector<8x72xbf16>, vector<72x256xbf16>, vector<8x256xf32> -> vector<8x256xf32>
    %61 = vector.broadcast %4 : vector<8x1xf32> to vector<8x256xf32>
    %62 = arith.addf %60, %61 : vector<8x256xf32>
    %cst_29 = arith.constant 0.000000e+00 : f32
    %63 = vector.broadcast %cst_29 : f32 to vector<8x256xf32>
    %64 = arith.maximumf %62, %63 : vector<8x256xf32>
    %c0_30 = arith.constant 0 : index
    %c0_31 = arith.constant 0 : index
    %65 = vector.load %arg4[%c0_30, %c0_31] : memref<16x8xbf16, #tpu.memory_space<vmem>>, vector<16x8xbf16>
    %66 = arith.truncf %64 : vector<8x256xf32> to vector<8x256xbf16>
    %cst_32 = arith.constant dense<0.000000e+00> : vector<16x256xf32>
    %67 = tpu.matmul %65, %66, %cst_32 {dimension_numbers = #tpu.dot_dimension_numbers<[1], [0], [0], [1], [0, 0, 1, 1], [], []>} : vector<16x8xbf16>, vector<8x256xbf16>, vector<16x256xf32> -> vector<16x256xf32>
    %68 = vector.broadcast %5 : vector<16x1xf32> to vector<16x256xf32>
    %69 = arith.addf %67, %68 : vector<16x256xf32>
    %70 = arith.addf %69, %1 : vector<16x256xf32>
    %cst_33 = arith.constant 0.000000e+00 : f32
    %71 = vector.broadcast %cst_33 : f32 to vector<16x256xf32>
    %72 = arith.maximumf %70, %71 : vector<16x256xf32>
    %c0_34 = arith.constant 0 : index
    %c0_35 = arith.constant 0 : index
    %c0_36 = arith.constant 0 : index
    %73 = vector.load %arg7[%c0_34, %c0_35, %c0_36] : memref<1x16x256xf32, #tpu.memory_space<vmem>>, vector<1x16x256xf32>
    %74 = vector.shape_cast %73 : vector<1x16x256xf32> to vector<16x256xf32>
    %75 = vector.shape_cast %72 : vector<16x256xf32> to vector<1x16x256xf32>
    tpu.vector_store %arg7[%c0_34, %c0_35, %c0_36], %75 {strides = array<i32>} : memref<1x16x256xf32, #tpu.memory_space<vmem>>, vector<1x16x256xf32>,
    return
  }
  func.func @transform_0(%arg0: i32) -> (i32, i32, i32) {
    %c0_i32 = arith.constant 0 : i32
    %c0_i32_0 = arith.constant 0 : i32
    %c0_i32_1 = arith.constant 0 : i32
    return %arg0, %c0_i32, %c0_i32_0 : i32, i32, i32
  }
  func.func @transform_1(%arg0: i32) -> (i32, i32) {
    %c0_i32 = arith.constant 0 : i32
    %c0_i32_0 = arith.constant 0 : i32
    %c0_i32_1 = arith.constant 0 : i32
    return %c0_i32, %c0_i32_0 : i32, i32
  }
  func.func @transform_2(%arg0: i32) -> (i32, i32) {
    %c0_i32 = arith.constant 0 : i32
    %c0_i32_0 = arith.constant 0 : i32
    %c0_i32_1 = arith.constant 0 : i32
    return %c0_i32, %c0_i32_0 : i32, i32
  }
  func.func @transform_3(%arg0: i32) -> (i32, i32) {
    %c0_i32 = arith.constant 0 : i32
    %c0_i32_0 = arith.constant 0 : i32
    %c0_i32_1 = arith.constant 0 : i32
    return %c0_i32, %c0_i32_0 : i32, i32
  }
  func.func @transform_4(%arg0: i32) -> (i32, i32) {
    %c0_i32 = arith.constant 0 : i32
    %c0_i32_0 = arith.constant 0 : i32
    %c0_i32_1 = arith.constant 0 : i32
    return %c0_i32, %c0_i32_0 : i32, i32
  }
  func.func @transform_5(%arg0: i32) -> (i32, i32, i32) {
    %c0_i32 = arith.constant 0 : i32
    %c0_i32_0 = arith.constant 0 : i32
    %c0_i32_1 = arith.constant 0 : i32
    %c0_i32_2 = arith.constant 0 : i32
    return %c0_i32, %c0_i32_0, %c0_i32_1 : i32, i32, i32
  }
  func.func @transform_6(%arg0: i32) -> (i32, i32, i32) {
    %c0_i32 = arith.constant 0 : i32
    %c0_i32_0 = arith.constant 0 : i32
    %c0_i32_1 = arith.constant 0 : i32
    return %arg0, %c0_i32, %c0_i32_0 : i32, i32, i32
  }
}

</mosaic_0001>

<llo_original>
// kernel: tpu_custom_call.1
$region0: #{tpu_custom_call.1}
  #allocation0 [shape = 'u32[]', space=smem, size = 0x4, offset = 0x4, fixed_abs, tag = 'smem constant byte address 0x4 - core index']
  #allocation1 [shape = 'u32[144,128]{1,0:T(1,128)}', space=vmem, size = 0x12000, scoped, tag = 'internal scratch']
  %s0 = inlined_call_operand.hbm [shape: f32[2,16,256], index: 0, kind: input, shape index: {}]
  %s1 = inlined_call_operand.vmem [shape: bf16[8,16], index: 1, kind: input, shape index: {}]
  %s2 = inlined_call_operand.vmem [shape: bf16[8,72], index: 2, kind: input, shape index: {}]
  %s3 = inlined_call_operand.vmem [shape: bf16[16,8], index: 3, kind: input, shape index: {}]
  %s4 = inlined_call_operand.vmem [shape: f32[32,1], index: 4, kind: input, shape index: {}]
  %s5 = inlined_call_operand.vmem [shape: f32[9,1,256], index: 5, kind: input, shape index: {}]
  %s6 = inlined_call_operand.hbm [shape: f32[2,16,256], index: 6, kind: output, shape index: {}]
  %s7 = sld [smem:[#allocation0]]
  $region61: #{tpu_custom_call.1} parent=0
    _
  %s9 = ssub.s32 1, %s7
  %s10 = scalar_select 0, %s9, %s7
  $region1: #{tpu_custom_call.1} parent=0
    #allocation2 [shape = 'u8[32768]{0}', space=vmem, size = 0x8000, scoped, tag = 'input window, operand 0']
    #allocation3 [shape = 's32[2]{0}', space=sflag, size = 0x8, scoped, tag = 'scoped memory for tpu_custom_call.1']
    #allocation4 [shape = 's32[2]{0}', space=sflag, size = 0x8, scoped, tag = 'scoped memory for tpu_custom_call.1']
    #allocation5 [shape = 'u8[32768]{0}', space=vmem, size = 0x8000, scoped, tag = 'output window, operand 0']
    %11 = vsyncpa [#allocation3], 0
    %s12 = scalar_lea.sflag [#allocation3], 1
    %13 = vsyncpa %s12, 0
    %14 = vsyncpa [#allocation4], 0
    %s15 = scalar_lea.sflag [#allocation4], 1
    %16 = vsyncpa %s15, 0
    loop: start=0, step=1, limit=4
    $region2: #{tpu_custom_call.1} parent=1 // loop_pre_header
      _
    $region3: #{tpu_custom_call.1} parent=1 // loop_header
      %s18 = sphi 0, %s22
      %p19 = scmp.ge.s32.totalorder %s18, 4
      %s28 = sphi 0, %s30
      %s31 = sphi 0, %s28
      %s32 = sphi 0, %s31
      %s48 = sphi 0, %s32
      %s52 = sphi 0, %s52
      %s54 = sphi 0, %s52
      %s55 = sphi 0, %s54
      %s69 = sphi 0, %s55
      %s73 = sphi 0, %s73
      %s75 = sphi 0, %s73
      %s76 = sphi 0, %s75
      %s90 = sphi 0, %s76
      %s94 = sphi 0, %s94
      %s96 = sphi 0, %s94
      %s97 = sphi 0, %s96
      %s111 = sphi 0, %s97
      %s115 = sphi 0, %s115
      %s117 = sphi 0, %s115
      %s118 = sphi 0, %s117
      %s132 = sphi 0, %s118
      %s136 = sphi 0, %s136
      %s138 = sphi 0, %s136
      %s139 = sphi 0, %s138
      %s153 = sphi 0, %s139
      %s159 = sphi 0, %s161
      %s162 = sphi 0, %s159
      %s163 = sphi 0, %s162
      %s179 = sphi 0, %s163
    $region4: #{tpu_custom_call.1} parent=1 // loop_header_branch
      %21 = sbr.rel (%p19) target = $region8
    $region5: #{tpu_custom_call.1} parent=1 // loop_body
      %s23 = ssub.s32 %s18, 1
      %s24 = ssub.s32 %s18, 2
      %s25 = sadd.s32 %s18, 1
      %s26 = ssub.s32 %s18, %s25
      %p27 = scmp.eq.s32.totalorder %s26, 0
      %s29 = sadd.s32 %s28, 1
      %s30 = scalar_select %p27, %s28, %s29
      %p33 = pneg %p27
      %p34 = scmp.eq.s32.totalorder %s18, 1
      %p35 = por %p33, %p34
      %p36 = scmp.ne.s32.totalorder %s28, %s31
      %p37 = scmp.eq.s32.totalorder %s18, 0
      %p38 = por %p36, %p37
      %p39 = scmp.ne.s32.totalorder %s28, %s31
      %p40 = scmp.eq.s32.totalorder %s23, 1
      %p41 = por %p39, %p40
      %p42 = scmp.ne.s32.totalorder %s31, %s32
      %p43 = scmp.eq.s32.totalorder %s23, 0
      %p44 = por %p42, %p43
      %p45 = scmp.ne.s32.totalorder %s31, %s32
      %p46 = scmp.eq.s32.totalorder %s24, 1
      %p47 = por %p45, %p46
      %p49 = scmp.ne.s32.totalorder %s32, %s48
      %p50 = scmp.eq.s32.totalorder %s24, 0
      %p51 = por %p49, %p50
      %s53 = sadd.s32 %s52, 1
      %p56 = scmp.eq.s32.totalorder %s18, 1
      %p57 = scmp.ne.s32.totalorder %s52, %s54
      %p58 = scmp.eq.s32.totalorder %s18, 0
      %p59 = por %p57, %p58
      %p60 = scmp.ne.s32.totalorder %s52, %s54
      %p61 = scmp.eq.s32.totalorder %s23, 1
      %p62 = por %p60, %p61
      %p63 = scmp.ne.s32.totalorder %s54, %s55
      %p64 = scmp.eq.s32.totalorder %s23, 0
      %p65 = por %p63, %p64
      %p66 = scmp.ne.s32.totalorder %s54, %s55
      %p67 = scmp.eq.s32.totalorder %s24, 1
      %p68 = por %p66, %p67
      %p70 = scmp.ne.s32.totalorder %s55, %s69
      %p71 = scmp.eq.s32.totalorder %s24, 0
      %p72 = por %p70, %p71
      %s74 = sadd.s32 %s73, 1
      %p77 = scmp.eq.s32.totalorder %s18, 1
      %p78 = scmp.ne.s32.totalorder %s73, %s75
      %p79 = scmp.eq.s32.totalorder %s18, 0
      %p80 = por %p78, %p79
      %p81 = scmp.ne.s32.totalorder %s73, %s75
      %p82 = scmp.eq.s32.totalorder %s23, 1
      %p83 = por %p81, %p82
      %p84 = scmp.ne.s32.totalorder %s75, %s76
      %p85 = scmp.eq.s32.totalorder %s23, 0
      %p86 = por %p84, %p85
      %p87 = scmp.ne.s32.totalorder %s75, %s76
      %p88 = scmp.eq.s32.totalorder %s24, 1
      %p89 = por %p87, %p88
      %p91 = scmp.ne.s32.totalorder %s76, %s90
      %p92 = scmp.eq.s32.totalorder %s24, 0
      %p93 = por %p91, %p92
      %s95 = sadd.s32 %s94, 1
      %p98 = scmp.eq.s32.totalorder %s18, 1
      %p99 = scmp.ne.s32.totalorder %s94, %s96
      %p100 = scmp.eq.s32.totalorder %s18, 0
      %p101 = por %p99, %p100
      %p102 = scmp.ne.s32.totalorder %s94, %s96
      %p103 = scmp.eq.s32.totalorder %s23, 1
      %p104 = por %p102, %p103
      %p105 = scmp.ne.s32.totalorder %s96, %s97
      %p106 = scmp.eq.s32.totalorder %s23, 0
      %p107 = por %p105, %p106
      %p108 = scmp.ne.s32.totalorder %s96, %s97
      %p109 = scmp.eq.s32.totalorder %s24, 1
      %p110 = por %p108, %p109
      %p112 = scmp.ne.s32.totalorder %s97, %s111
      %p113 = scmp.eq.s32.totalorder %s24, 0
      %p114 = por %p112, %p113
      %s116 = sadd.s32 %s115, 1
      %p119 = scmp.eq.s32.totalorder %s18, 1
      %p120 = scmp.ne.s32.totalorder %s115, %s117
      %p121 = scmp.eq.s32.totalorder %s18, 0
      %p122 = por %p120, %p121
      %p123 = scmp.ne.s32.totalorder %s115, %s117
      %p124 = scmp.eq.s32.totalorder %s23, 1
      %p125 = por %p123, %p124
      %p126 = scmp.ne.s32.totalorder %s117, %s118
      %p127 = scmp.eq.s32.totalorder %s23, 0
      %p128 = por %p126, %p127
      %p129 = scmp.ne.s32.totalorder %s117, %s118
      %p130 = scmp.eq.s32.totalorder %s24, 1
      %p131 = por %p129, %p130
      %p133 = scmp.ne.s32.totalorder %s118, %s132
      %p134 = scmp.eq.s32.totalorder %s24, 0
      %p135 = por %p133, %p134
      %s137 = sadd.s32 %s136, 1
      %p140 = scmp.eq.s32.totalorder %s18, 1
      %p141 = scmp.ne.s32.totalorder %s136, %s138
      %p142 = scmp.eq.s32.totalorder %s18, 0
      %p143 = por %p141, %p142
      %p144 = scmp.ne.s32.totalorder %s136, %s138
      %p145 = scmp.eq.s32.totalorder %s23, 1
      %p146 = por %p144, %p145
      %p147 = scmp.ne.s32.totalorder %s138, %s139
      %p148 = scmp.eq.s32.totalorder %s23, 0
      %p149 = por %p147, %p148
      %p150 = scmp.ne.s32.totalorder %s138, %s139
      %p151 = scmp.eq.s32.totalorder %s24, 1
      %p152 = por %p150, %p151
      %p154 = scmp.ne.s32.totalorder %s139, %s153
      %p155 = scmp.eq.s32.totalorder %s24, 0
      %p156 = por %p154, %p155
      %s157 = ssub.s32 %s18, %s25
      %p158 = scmp.eq.s32.totalorder %s157, 0
      %s160 = sadd.s32 %s159, 1
      %s161 = scalar_select %p158, %s159, %s160
      %p164 = pneg %p158
      %p165 = scmp.eq.s32.totalorder %s18, 1
      %p166 = por %p164, %p165
      %p167 = scmp.ne.s32.totalorder %s159, %s162
      %p168 = scmp.eq.s32.totalorder %s18, 0
      %p169 = por %p167, %p168
      %p170 = scmp.ne.s32.totalorder %s159, %s162
      %p171 = scmp.eq.s32.totalorder %s23, 1
      %p172 = por %p170, %p171
      %p173 = scmp.ne.s32.totalorder %s162, %s163
      %p174 = scmp.eq.s32.totalorder %s23, 0
      %p175 = por %p173, %p174
      %p176 = scmp.ne.s32.totalorder %s162, %s163
      %p177 = scmp.eq.s32.totalorder %s24, 1
      %p178 = por %p176, %p177
      %p180 = scmp.ne.s32.totalorder %s163, %s179
      %p181 = scmp.eq.s32.totalorder %s24, 0
      %p182 = por %p180, %p181
      %p183 = scmp.le.s32.totalorder 1, %s18
      %p184 = scmp.lt.s32.totalorder %s18, 3
      %p185 = pnand %p183, %p184
      %p186 = pneg %p185
      // Predicated region
      $region9: #{tpu_custom_call.1} parent=5 // pred_check
        _
      $region10: #{tpu_custom_call.1} parent=5 // pred_check_branch
        %188 = sbr.rel (%p185) target = $region12
      $region11: #{tpu_custom_call.1} parent=5 // pred_region
        %s189 = ssub.s32 %s18, 1
        // Predicated region
        $region13: #{tpu_custom_call.1} parent=11 // pred_check
          %p190 = pneg %p65
        $region14: #{tpu_custom_call.1} parent=11 // pred_check_branch
          %192 = sbr.rel (%p190) target = $region16
        $region15: #{tpu_custom_call.1} parent=11 // pred_region
          _
        $region16: #{tpu_custom_call.1} parent=11 // pred_fallthru
          _
        // Predicated region
        $region17: #{tpu_custom_call.1} parent=11 // pred_check
          %p193 = pneg %p86
        $region18: #{tpu_custom_call.1} parent=11 // pred_check_branch
          %195 = sbr.rel (%p193) target = $region20
        $region19: #{tpu_custom_call.1} parent=11 // pred_region
          _
        $region20: #{tpu_custom_call.1} parent=11 // pred_fallthru
          _
        // Predicated region
        $region21: #{tpu_custom_call.1} parent=11 // pred_check
          %p196 = pneg %p107
        $region22: #{tpu_custom_call.1} parent=11 // pred_check_branch
          %198 = sbr.rel (%p196) target = $region24
        $region23: #{tpu_custom_call.1} parent=11 // pred_region
          _
        $region24: #{tpu_custom_call.1} parent=11 // pred_fallthru
          _
        // Predicated region
        $region25: #{tpu_custom_call.1} parent=11 // pred_check
          %p199 = pneg %p128
        $region26: #{tpu_custom_call.1} parent=11 // pred_check_branch
          %201 = sbr.rel (%p199) target = $region28
        $region27: #{tpu_custom_call.1} parent=11 // pred_region
          _
        $region28: #{tpu_custom_call.1} parent=11 // pred_fallthru
          _
        // Predicated region
        $region29: #{tpu_custom_call.1} parent=11 // pred_check
          %p202 = pneg %p149
        $region30: #{tpu_custom_call.1} parent=11 // pred_check_branch
          %204 = sbr.rel (%p202) target = $region32
        $region31: #{tpu_custom_call.1} parent=11 // pred_region
          _
        $region32: #{tpu_custom_call.1} parent=11 // pred_fallthru
          _
      $region12: #{tpu_custom_call.1} parent=5 // pred_fallthru
        _
      %p205 = scmp.lt.s32.totalorder %s18, 2
      // Predicated region
      $region33: #{tpu_custom_call.1} parent=5 // pred_check
        %p206 = pneg %p205
      $region34: #{tpu_custom_call.1} parent=5 // pred_check_branch
        %208 = sbr.rel (%p206) target = $region36
      $region35: #{tpu_custom_call.1} parent=5 // pred_region
        // Predicated region
        $region37: #{tpu_custom_call.1} parent=35 // pred_check
          %p209 = pneg %p38
        $region38: #{tpu_custom_call.1} parent=35 // pred_check_branch
          %211 = sbr.rel (%p209) target = $region40
        $region39: #{tpu_custom_call.1} parent=35 // pred_region
          %s212 = sand.u32 %s28, 1
          %s213 = scalar_lea.sflag [#allocation3], %s212
          %s214 = sand.u32 %s28, 1
          %s215 = smul.addr %s214, 32
          %s216 = scalar_lea.vmem [#allocation2], %s215
          %s218 = ssub.s32 512, 512
          %219 = vsyncadd %s213, %s218
          %s220 = smul.addr %s18, 4
          %s221 = smul.addr %s220, 128
          %s222 = scalar_lea.hbm %s0, %s221
          %s223 = sshll.u32 %s216, 4
          %s224 = int_to_ptr.vmem [resolvable:$true] %s223
          %229 = dma.hbm_to_vmem [thread:$0]  %s222, 512, %s224, %s213, 256, 256, 16
        $region40: #{tpu_custom_call.1} parent=35 // pred_fallthru
          _
      $region36: #{tpu_custom_call.1} parent=5 // pred_fallthru
        _
      %p230 = scmp.le.s32.totalorder 1, %s18
      %p231 = scmp.lt.s32.totalorder %s18, 3
      %p232 = pnand %p230, %p231
      %p233 = pneg %p232
      // Predicated region
      $region41: #{tpu_custom_call.1} parent=5 // pred_check
        _
      $region42: #{tpu_custom_call.1} parent=5 // pred_check_branch
        %235 = sbr.rel (%p232) target = $region44
      $region43: #{tpu_custom_call.1} parent=5 // pred_region
        %s236 = ssub.s32 %s18, 1
        %s237 = sand.u32 %s31, 1
        %s238 = scalar_lea.sflag [#allocation3], %s237
        %s239 = sand.u32 %s31, 1
        %s240 = smul.addr %s239, 32
        %s241 = scalar_lea.vmem [#allocation2], %s240
        // Predicated region
        $region45: #{tpu_custom_call.1} parent=43 // pred_check
          %p242 = pneg %p44
        $region46: #{tpu_custom_call.1} parent=43 // pred_check_branch
          %244 = sbr.rel (%p242) target = $region48
        $region47: #{tpu_custom_call.1} parent=43 // pred_region
          %245 = dma.done %s238, 512
        $region48: #{tpu_custom_call.1} parent=43 // pred_fallthru
          _
        %s246 = sand.u32 %s31, 1
        %s247 = scalar_lea.sflag [#allocation3], %s246
        %s248 = sand.u32 %s31, 1
        %s249 = smul.addr %s248, 32
        %s250 = scalar_lea.vmem [#allocation2], %s249
        %p251 = pneg %p44
        %p252 = pneg %p41
        %p253 = pneg %p65
        %p254 = pneg %p62
        %p255 = pneg %p86
        %p256 = pneg %p83
        %p257 = pneg %p107
        %p258 = pneg %p104
        %p259 = pneg %p128
        %p260 = pneg %p125
        %p261 = pneg %p149
        %p262 = pneg %p146
        %p263 = pneg %p175
        %p264 = pneg %p172
        %s265 = sand.u32 %s162, 1
        %s266 = scalar_lea.sflag [#allocation4], %s265
        %s267 = sand.u32 %s162, 1
        %s268 = smul.addr %s267, 32
        %s269 = scalar_lea.vmem [#allocation5], %s268
        %v271 = vld [vmem:[%s241] sm:$0xff]
        %v272 = vld [vmem:[%s241 + $0x8] sm:$0xff]
        %v273 = vld [vmem:[%s241 + $0x10] sm:$0xff]
        %v274 = vld [vmem:[%s241 + $0x18] sm:$0xff]
        %v275 = vld [vmem:[%s4] sm:$0xff]
        %v276 = vld [vmem:[%s4 + $0x8] sm:$0xff]
        %v277 = vld [vmem:[%s4 + $0x10] sm:$0xff]
        %v278 = vld [vmem:[%s4 + $0x18] sm:$0xff]
        %v279 = vld [vmem:[%s1] sm:$0xf]
        %v280 = vpack.c.bf16 %v273, %v271
        %v281 = vpack.c.bf16 %v274, %v272
        %283 = vset.pattern.permute.xlu0 0
        %284 = vperm.xlu0 %283, %v275
        %v285 = vpop.permute.xlu0 %284
        %vm287 = vcmask 130048
        %v289 = vsel %vm287, %v279, 0
        %291 = vmatprep.subr.bf16.mxu0 %v281
        %292 = vmatpush1.bf16.msra.mxu0 %v280
        %293 = vmatprep.subr.bf16.mxu0 0
        %294 = vmatpush1.bf16.msra.mxu0 0
        %295 = vmatprep.subr.bf16.mxu0 0
        %296 = vmatpush1.bf16.msra.mxu0 0
        %297 = vmatprep.subr.bf16.mxu0 0
        %298 = vmatpush1.bf16.msra.mxu0 0
        %299 = vmatprep.subr.bf16.mxu0 0
        %300 = vmatpush1.bf16.msra.mxu0 0
        %301 = vmatprep.subr.bf16.mxu0 0
        %302 = vmatpush1.bf16.msra.mxu0 0
        %303 = vmatprep.subr.bf16.mxu0 0
        %304 = vmatpush1.bf16.msra.mxu0 0
        %305 = vmatprep.subr.bf16.mxu0 0
        %306 = vmatpush1.bf16.msra.mxu0 0
        %307 = vmatprep.subr.bf16.mxu0 0
        %308 = vmatpush1.bf16.msra.mxu0 0
        %309 = vmatprep.subr.bf16.mxu0 0
        %310 = vmatpush1.bf16.msra.mxu0 0
        %311 = vmatprep.subr.bf16.mxu0 0
        %312 = vmatpush1.bf16.msra.mxu0 0
        %313 = vmatprep.subr.bf16.mxu0 0
        %314 = vmatpush1.bf16.msra.mxu0 0
        %315 = vmatprep.subr.bf16.mxu0 0
        %316 = vmatpush1.bf16.msra.mxu0 0
        %317 = vmatprep.subr.bf16.mxu0 0
        %318 = vmatpush1.bf16.msra.mxu0 0
        %319 = vmatprep.subr.bf16.mxu0 0
        %320 = vmatpush1.bf16.msra.mxu0 0
        %321 = vmatprep.subr.bf16.mxu0 0
        %322 = vmatpush1.bf16.msra.mxu0 0
        %323 = vmatprep.mubr.bf16.mxu0 0
        %324 = vmatmul.mubr.bf16.gmra.mrb[0].mxu0 %v289
        %v325 = vpop.f32.mrb[0].mxu0
        %v326 = vadd.f32 %v285, %v325
        %v327 = vpop.f32.mrb[0].mxu0
        %v328 = vadd.f32 %v285, %v327
        %v329 = vpop.f32.mrb[0].mxu0
        %v330 = vpop.f32.mrb[0].mxu0
        %331 = vdwg.mxu0
        %v332 = vmax.f32 %v326, 0.0
        %v333 = vmax.f32 %v328, 0.0
        %334 = vrot.lane.b32.xlu0 %v332, 17
        %v335 = vpop.permute.xlu0 %334
        %336 = vrot.lane.b32.xlu0 %v333, 17
        %v337 = vpop.permute.xlu0 %336
        %v338 = vlaneseq
        %v339 = vand.u32 %v338, 127
        %vm340 = vcmp.lt.s32.totalorder %v339, 17
        %v341 = vsel %vm340, %v335, %v337
        %v342 = vsel %vm340, %v337, %v335
        %v343 = vld [vmem:[%s5] sm:$0x3]
        %v345 = vlaneseq
        %v346 = vshrl.u32 %v345, 7
        %v347 = vsub.s32 0, %v346
        %v348 = vrot.slane %v343, %v347
        %v349 = vlaneseq
        %v350 = vshrl.u32 %v349, 7
        %v351 = vsub.s32 1, %v350
        %v352 = vrot.slane %v343, %v351
        %v355 = vmul.f32 %v342, %v348
        %v356 = vmul.f32 %v341, %v352
        %357 = vrot.lane.b32.xlu0 %v332, 16
        %v358 = vpop.permute.xlu0 %357
        %359 = vrot.lane.b32.xlu0 %v333, 16
        %v360 = vpop.permute.xlu0 %359
        %vm361 = vcmp.lt.s32.totalorder %v339, 16
        %v362 = vsel %vm361, %v358, %v360
        %v363 = vsel %vm361, %v360, %v358
        %s364 = scalar_lea.vmem %s5, 2
        %v365 = vld [vmem:[%s364] sm:$0x3]
        %v367 = vlaneseq
        %v368 = vshrl.u32 %v367, 7
        %v369 = vsub.s32 0, %v368
        %v370 = vrot.slane %v365, %v369
        %v371 = vlaneseq
        %v372 = vshrl.u32 %v371, 7
        %v373 = vsub.s32 1, %v372
        %v374 = vrot.slane %v365, %v373
        %v377 = vmul.f32 %v363, %v370
        %v378 = vmul.f32 %v362, %v374
        %379 = vrot.lane.b32.xlu0 %v332, 15
        %v380 = vpop.permute.xlu0 %379
        %381 = vrot.lane.b32.xlu0 %v333, 15
        %v382 = vpop.permute.xlu0 %381
        %vm383 = vcmp.lt.s32.totalorder %v339, 15
        %v384 = vsel %vm383, %v380, %v382
        %v385 = vsel %vm383, %v382, %v380
        %s386 = scalar_lea.vmem %s5, 4
        %v387 = vld [vmem:[%s386] sm:$0x3]
        %v389 = vlaneseq
        %v390 = vshrl.u32 %v389, 7
        %v391 = vsub.s32 0, %v390
        %v392 = vrot.slane %v387, %v391
        %v393 = vlaneseq
        %v394 = vshrl.u32 %v393, 7
        %v395 = vsub.s32 1, %v394
        %v396 = vrot.slane %v387, %v395
        %v399 = vmul.f32 %v385, %v392
        %v400 = vmul.f32 %v384, %v396
        %401 = vrot.lane.b32.xlu0 %v332, 1
        %v402 = vpop.permute.xlu0 %401
        %403 = vrot.lane.b32.xlu0 %v333, 1
        %v404 = vpop.permute.xlu0 %403
        %vm405 = vcmp.lt.s32.totalorder %v339, 1
        %v406 = vsel %vm405, %v402, %v404
        %v407 = vsel %vm405, %v404, %v402
        %s408 = scalar_lea.vmem %s5, 6
        %v409 = vld [vmem:[%s408] sm:$0x3]
        %v411 = vlaneseq
        %v412 = vshrl.u32 %v411, 7
        %v413 = vsub.s32 0, %v412
        %v414 = vrot.slane %v409, %v413
        %v415 = vlaneseq
        %v416 = vshrl.u32 %v415, 7
        %v417 = vsub.s32 1, %v416
        %v418 = vrot.slane %v409, %v417
        %v421 = vmul.f32 %v407, %v414
        %v422 = vmul.f32 %v406, %v418
        %s423 = scalar_lea.vmem %s5, 8
        %v424 = vld [vmem:[%s423] sm:$0x3]
        %v426 = vlaneseq
        %v427 = vshrl.u32 %v426, 7
        %v428 = vsub.s32 0, %v427
        %v429 = vrot.slane %v424, %v428
        %v430 = vlaneseq
        %v431 = vshrl.u32 %v430, 7
        %v432 = vsub.s32 1, %v431
        %v433 = vrot.slane %v424, %v432
        %v436 = vmul.f32 %v332, %v429
        %v437 = vmul.f32 %v333, %v433
        %438 = vrot.lane.b32.xlu0 %v332, 127
        %v439 = vpop.permute.xlu0 %438
        %440 = vrot.lane.b32.xlu0 %v333, 127
        %v441 = vpop.permute.xlu0 %440
        %vm442 = vcmp.lt.s32.totalorder %v339, 127
        %v443 = vsel %vm442, %v439, %v441
        %v444 = vsel %vm442, %v441, %v439
        %s445 = scalar_lea.vmem %s5, 10
        %v446 = vld [vmem:[%s445] sm:$0x3]
        %v448 = vlaneseq
        %v449 = vshrl.u32 %v448, 7
        %v450 = vsub.s32 0, %v449
        %v451 = vrot.slane %v446, %v450
        %v452 = vlaneseq
        %v453 = vshrl.u32 %v452, 7
        %v454 = vsub.s32 1, %v453
        %v455 = vrot.slane %v446, %v454
        %v458 = vmul.f32 %v443, %v451
        %v459 = vmul.f32 %v444, %v455
        %460 = vrot.lane.b32.xlu0 %v332, 113
        %v461 = vpop.permute.xlu0 %460
        %462 = vrot.lane.b32.xlu0 %v333, 113
        %v463 = vpop.permute.xlu0 %462
        %vm464 = vcmp.lt.s32.totalorder %v339, 113
        %v465 = vsel %vm464, %v461, %v463
        %v466 = vsel %vm464, %v463, %v461
        %s467 = scalar_lea.vmem %s5, 12
        %v468 = vld [vmem:[%s467] sm:$0x3]
        %v470 = vlaneseq
        %v471 = vshrl.u32 %v470, 7
        %v472 = vsub.s32 0, %v471
        %v473 = vrot.slane %v468, %v472
        %v474 = vlaneseq
        %v475 = vshrl.u32 %v474, 7
        %v476 = vsub.s32 1, %v475
        %v477 = vrot.slane %v468, %v476
        %v480 = vmul.f32 %v465, %v473
        %v481 = vmul.f32 %v466, %v477
        %482 = vrot.lane.b32.xlu0 %v332, 112
        %v483 = vpop.permute.xlu0 %482
        %484 = vrot.lane.b32.xlu0 %v333, 112
        %v485 = vpop.permute.xlu0 %484
        %vm486 = vcmp.lt.s32.totalorder %v339, 112
        %v487 = vsel %vm486, %v483, %v485
        %v488 = vsel %vm486, %v485, %v483
        %s489 = scalar_lea.vmem %s5, 14
        %v490 = vld [vmem:[%s489] sm:$0x3]
        %v492 = vlaneseq
        %v493 = vshrl.u32 %v492, 7
        %v494 = vsub.s32 0, %v493
        %v495 = vrot.slane %v490, %v494
        %v496 = vlaneseq
        %v497 = vshrl.u32 %v496, 7
        %v498 = vsub.s32 1, %v497
        %v499 = vrot.slane %v490, %v498
        %v502 = vmul.f32 %v487, %v495
        %v503 = vmul.f32 %v488, %v499
        %504 = vrot.lane.b32.xlu0 %v332, 111
        %v505 = vpop.permute.xlu0 %504
        %506 = vrot.lane.b32.xlu0 %v333, 111
        %v507 = vpop.permute.xlu0 %506
        %vm508 = vcmp.lt.s32.totalorder %v339, 111
        %v509 = vsel %vm508, %v505, %v507
        %v510 = vsel %vm508, %v507, %v505
        %s511 = scalar_lea.vmem %s5, 16
        %v512 = vld [vmem:[%s511] sm:$0x3]
        %v514 = vlaneseq
        %v515 = vshrl.u32 %v514, 7
        %v516 = vsub.s32 0, %v515
        %v517 = vrot.slane %v512, %v516
        %v518 = vlaneseq
        %v519 = vshrl.u32 %v518, 7
        %v520 = vsub.s32 1, %v519
        %v521 = vrot.slane %v512, %v520
        %v524 = vmul.f32 %v509, %v517
        %v525 = vmul.f32 %v510, %v521
        %v526 = vpack.c.bf16 %v377, %v355
        %v527 = vpack.c.bf16 %v378, %v356
        %v528 = vpack.c.bf16 %v421, %v399
        %v529 = vpack.c.bf16 %v422, %v400
        %v530 = vpack.c.bf16 %v458, %v436
        %v531 = vpack.c.bf16 %v459, %v437
        %v532 = vpack.c.bf16 %v502, %v480
        %v533 = vpack.c.bf16 %v503, %v481
        %v534 = vpack.c.bf16 %v524, %v524
        %v535 = vpack.c.bf16 %v525, %v525
        %v536 = vld [vmem:[%s2] sm:$0xf]
        %538 = vset.pattern.permute.xlu0 0
        %539 = vperm.xlu0 %538, %v276
        %v540 = vpop.permute.xlu0 %539
        %vm542 = vcmask 588800
        %v544 = vsel %vm542, %v536, 0
        %vm546 = vcmask 1043456
        %v548 = vsel %vm546, %v534, 0
        %v551 = vsel %vm546, %v535, 0
        %553 = vmatprep.subr.bf16.mxu0 %v527
        %554 = vmatpush1.bf16.msra.mxu0 %v526
        %555 = vmatprep.subr.bf16.mxu0 %v529
        %556 = vmatpush1.bf16.msra.mxu0 %v528
        %557 = vmatprep.subr.bf16.mxu0 %v531
        %558 = vmatpush1.bf16.msra.mxu0 %v530
        %559 = vmatprep.subr.bf16.mxu0 %v533
        %560 = vmatpush1.bf16.msra.mxu0 %v532
        %561 = vmatprep.subr.bf16.mxu0 %v551
        %562 = vmatpush1.bf16.msra.mxu0 %v548
        %563 = vmatprep.subr.bf16.mxu0 0
        %564 = vmatpush1.bf16.msra.mxu0 0
        %565 = vmatprep.subr.bf16.mxu0 0
        %566 = vmatpush1.bf16.msra.mxu0 0
        %567 = vmatprep.subr.bf16.mxu0 0
        %568 = vmatpush1.bf16.msra.mxu0 0
        %569 = vmatprep.subr.bf16.mxu0 0
        %570 = vmatpush1.bf16.msra.mxu0 0
        %571 = vmatprep.subr.bf16.mxu0 0
        %572 = vmatpush1.bf16.msra.mxu0 0
        %573 = vmatprep.subr.bf16.mxu0 0
        %574 = vmatpush1.bf16.msra.mxu0 0
        %575 = vmatprep.subr.bf16.mxu0 0
        %576 = vmatpush1.bf16.msra.mxu0 0
        %577 = vmatprep.subr.bf16.mxu0 0
        %578 = vmatpush1.bf16.msra.mxu0 0
        %579 = vmatprep.subr.bf16.mxu0 0
        %580 = vmatpush1.bf16.msra.mxu0 0
        %581 = vmatprep.subr.bf16.mxu0 0
        %582 = vmatpush1.bf16.msra.mxu0 0
        %583 = vmatprep.subr.bf16.mxu0 0
        %584 = vmatpush1.bf16.msra.mxu0 0
        %585 = vmatprep.mubr.bf16.mxu0 0
        %586 = vmatmul.mubr.bf16.gmra.mrb[0].mxu0 %v544
        %v587 = vpop.f32.mrb[0].mxu0
        %v588 = vadd.f32 %v540, %v587
        %v589 = vpop.f32.mrb[0].mxu0
        %v590 = vadd.f32 %v540, %v589
        %v591 = vpop.f32.mrb[0].mxu0
        %v592 = vpop.f32.mrb[0].mxu0
        %593 = vdwg.mxu0
        %v594 = vmax.f32 %v588, 0.0
        %v595 = vmax.f32 %v590, 0.0
        %v596 = vld [vmem:[%s3] sm:$0xf]
        %v597 = vld [vmem:[%s3 + $0x4] sm:$0xf]
        %v598 = vpack.c.bf16 %v594, %v594
        %v599 = vpack.c.bf16 %v595, %v595
        %601 = vset.pattern.permute.xlu0 0
        %602 = vperm.xlu0 %601, %v277
        %v603 = vpop.permute.xlu0 %602
        %606 = vset.pattern.permute.xlu0 0
        %607 = vperm.xlu0 %606, %v278
        %v608 = vpop.permute.xlu0 %607
        %v612 = vunpack.c.l.b16 %v596
        %v613 = vunpack.c.l.b16 %v597
        %v614 = vpack.c.b16 %v613, %v612
        %vm615 = vcmask 64512
        %v617 = vsel %vm615, %v614, 0
        %v620 = vsel %vm546, %v598, 0
        %v623 = vsel %vm546, %v599, 0
        %625 = vmatprep.subr.bf16.mxu0 %v623
        %626 = vmatpush1.bf16.msra.mxu0 %v620
        %627 = vmatprep.subr.bf16.mxu0 0
        %628 = vmatpush1.bf16.msra.mxu0 0
        %629 = vmatprep.subr.bf16.mxu0 0
        %630 = vmatpush1.bf16.msra.mxu0 0
        %631 = vmatprep.subr.bf16.mxu0 0
        %632 = vmatpush1.bf16.msra.mxu0 0
        %633 = vmatprep.subr.bf16.mxu0 0
        %634 = vmatpush1.bf16.msra.mxu0 0
        %635 = vmatprep.subr.bf16.mxu0 0
        %636 = vmatpush1.bf16.msra.mxu0 0
        %637 = vmatprep.subr.bf16.mxu0 0
        %638 = vmatpush1.bf16.msra.mxu0 0
        %639 = vmatprep.subr.bf16.mxu0 0
        %640 = vmatpush1.bf16.msra.mxu0 0
        %641 = vmatprep.subr.bf16.mxu0 0
        %642 = vmatpush1.bf16.msra.mxu0 0
        %643 = vmatprep.subr.bf16.mxu0 0
        %644 = vmatpush1.bf16.msra.mxu0 0
        %645 = vmatprep.subr.bf16.mxu0 0
        %646 = vmatpush1.bf16.msra.mxu0 0
        %647 = vmatprep.subr.bf16.mxu0 0
        %648 = vmatpush1.bf16.msra.mxu0 0
        %649 = vmatprep.subr.bf16.mxu0 0
        %650 = vmatpush1.bf16.msra.mxu0 0
        %651 = vmatprep.subr.bf16.mxu0 0
        %652 = vmatpush1.bf16.msra.mxu0 0
        %653 = vmatprep.subr.bf16.mxu0 0
        %654 = vmatpush1.bf16.msra.mxu0 0
        %655 = vmatprep.subr.bf16.mxu0 0
        %656 = vmatpush1.bf16.msra.mxu0 0
        %657 = vmatprep.mubr.bf16.mxu0 0
        %658 = vmatmul.mubr.bf16.gmra.mrb[0].mxu0 %v617
        %v659 = vpop.f32.mrb[0].mxu0
        %v660 = vadd.f32 %v603, %v659
        %v661 = vpop.f32.mrb[0].mxu0
        %v662 = vadd.f32 %v603, %v661
        %v663 = vpop.f32.mrb[0].mxu0
        %v664 = vadd.f32 %v608, %v663
        %v665 = vpop.f32.mrb[0].mxu0
        %v666 = vadd.f32 %v608, %v665
        %667 = vdwg.mxu0
        %v668 = vadd.f32 %v660, %v271
        %v669 = vadd.f32 %v662, %v272
        %v670 = vadd.f32 %v664, %v273
        %v671 = vadd.f32 %v666, %v274
        %v672 = vmax.f32 %v668, 0.0
        %v673 = vmax.f32 %v669, 0.0
        %v674 = vmax.f32 %v670, 0.0
        %v675 = vmax.f32 %v671, 0.0
        %676 = vst [vmem:[%s269] sm:$0xff] %v672
        %677 = vst [vmem:[%s269 + $0x8] sm:$0xff] %v673
        %678 = vst [vmem:[%s269 + $0x10] sm:$0xff] %v674
        %679 = vst [vmem:[%s269 + $0x18] sm:$0xff] %v675
        %s680 = sand.u32 %s162, 1
        %s681 = scalar_lea.sflag [#allocation4], %s680
        %s682 = sand.u32 %s162, 1
        %s683 = smul.addr %s682, 32
        %s684 = scalar_lea.vmem [#allocation5], %s683
        // Predicated region
        $region49: #{tpu_custom_call.1} parent=43 // pred_check
          %p685 = pneg %p172
        $region50: #{tpu_custom_call.1} parent=43 // pred_check_branch
          %687 = sbr.rel (%p685) target = $region52
        $region51: #{tpu_custom_call.1} parent=43 // pred_region
          %s689 = ssub.s32 512, 512
          %690 = vsyncadd %s681, %s689
          %s691 = smul.addr %s23, 4
          %s692 = smul.addr %s691, 128
          %s693 = scalar_lea.hbm %s6, %s692
          %s694 = sshll.u32 %s684, 4
          %s695 = int_to_ptr.vmem [resolvable:$true] %s694
          %700 = dma.vmem_to_hbm [thread:$0]  %s695, 512, %s693, %s681, 256, 256, 16
        $region52: #{tpu_custom_call.1} parent=43 // pred_fallthru
          _
      $region44: #{tpu_custom_call.1} parent=5 // pred_fallthru
        _
      %p701 = scmp.le.s32.totalorder 2, %s18
      // Predicated region
      $region53: #{tpu_custom_call.1} parent=5 // pred_check
        %p702 = pneg %p701
      $region54: #{tpu_custom_call.1} parent=5 // pred_check_branch
        %704 = sbr.rel (%p702) target = $region56
      $region55: #{tpu_custom_call.1} parent=5 // pred_region
        %s705 = ssub.s32 %s18, 2
        // Predicated region
        $region57: #{tpu_custom_call.1} parent=55 // pred_check
          %p706 = pneg %p178
        $region58: #{tpu_custom_call.1} parent=55 // pred_check_branch
          %708 = sbr.rel (%p706) target = $region60
        $region59: #{tpu_custom_call.1} parent=55 // pred_region
          %s709 = sand.u32 %s163, 1
          %s710 = scalar_lea.sflag [#allocation4], %s709
          %s711 = sand.u32 %s163, 1
          %s712 = smul.addr %s711, 32
          %s713 = scalar_lea.vmem [#allocation5], %s712
          %714 = dma.done %s710, 512
        $region60: #{tpu_custom_call.1} parent=55 // pred_fallthru
          _
      $region56: #{tpu_custom_call.1} parent=5 // pred_fallthru
        _
    $region6: #{tpu_custom_call.1} parent=1 // loop_footer
      %s22 = sadd.s32 1, %s18
    $region7: #{tpu_custom_call.1} parent=1 // loop_footer_branch
      %17 = sbr.rel target = $region3
    $region8: #{tpu_custom_call.1} parent=1 // loop_exit
      _
    %715 = vsyncpa [#allocation3], 1
    %s716 = scalar_lea.sflag [#allocation3], 1
    %717 = vsyncpa %s716, 1
    %718 = vsyncpa [#allocation4], 1
    %s719 = scalar_lea.sflag [#allocation4], 1
    %720 = vsyncpa %s719, 1

</llo_original>
